<compile_context>
chip_gen: v5e
topology: v5e:2x2
jax: 0.10.0
libtpu: 0.0.40
codegen_flags: <defaults>
</compile_context>

<pallas_src>
import functools

import jax
import jax.numpy as jnp
from jax.experimental import pallas as pl
from jax.experimental.pallas import tpu as pltpu


# ---------------------------------------------------------------------------
# Hardware query (trace-time, cached)
# ---------------------------------------------------------------------------
@functools.lru_cache(maxsize=1)
def _vmem_capacity_bytes():
    try:
        return int(pltpu.get_tpu_info().vmem_capacity_bytes)
    except Exception:
        return 64 << 20  # conservative fallback (v7x per-TensorCore VMEM)


def _vmem_budget_bytes():
    # ~48 MiB on v7x (64 MiB physical), ~96 MiB on v5e/v6e (128 MiB physical).
    return max(32 << 20, (_vmem_capacity_bytes() * 3) // 4)


# ---------------------------------------------------------------------------
# Kernels
# ---------------------------------------------------------------------------
def _linear_kernel_fullk(x_ref, w_ref, b_ref, o_ref, *, compute_dtype):
    """Single full-K block: y_tile = x_tile @ w_tile + bias (no accumulator)."""
    x = x_ref[...]
    w = w_ref[...]
    if compute_dtype is not None:
        cd = jnp.dtype(compute_dtype)
        if x.dtype != cd:
            x = x.astype(cd)  # VPU filler, hidden under MXU work
        if w.dtype != cd:
            w = w.astype(cd)  # no-op: weight is stored in compute_dtype
    acc = jnp.dot(x, w, preferred_element_type=jnp.float32)
    o_ref[...] = (acc + b_ref[...].astype(jnp.float32)).astype(o_ref.dtype)


def _linear_kernel_splitk(x_ref, w_ref, b_ref, o_ref, acc_ref, *, compute_dtype):
    """Split-K accumulator kernel; bias is folded into the k==0 init."""
    @pl.when(pl.program_id(2) == 0)
    def _():
        acc_ref[...] = jnp.broadcast_to(
            b_ref[...].astype(jnp.float32), acc_ref.shape
        )

    x = x_ref[...]
    w = w_ref[...]
    if compute_dtype is not None:
        cd = jnp.dtype(compute_dtype)
        if x.dtype != cd:
            x = x.astype(cd)
        if w.dtype != cd:
            w = w.astype(cd)
    acc_ref[...] += jnp.dot(x, w, preferred_element_type=jnp.float32)

    @pl.when(pl.program_id(2) == pl.num_programs(2) - 1)
    def _():
        o_ref[...] = acc_ref[...].astype(o_ref.dtype)


# ---------------------------------------------------------------------------
# Helpers
# ---------------------------------------------------------------------------
def _round_up(x, m):
    return ((x + m - 1) // m) * m


# ---------------------------------------------------------------------------
# Jitted forward (weights arrive pre-transposed / pre-padded)
# ---------------------------------------------------------------------------
@functools.partial(
    jax.jit,
    static_argnames=("tm_pref", "tn", "tk", "split_k", "compute_dtype", "out_features"),
)
def _linear_forward(x, w_p, b_p, *, tm_pref, tn, tk, split_k, compute_dtype, out_features):
    in_features = x.shape[-1]
    lead_shape = x.shape[:-1]
    x2 = x.reshape(-1, in_features)
    M, K = x2.shape
    Kp, Np = w_p.shape

    x_bytes = jnp.dtype(x.dtype).itemsize
    w_bytes = jnp.dtype(w_p.dtype).itemsize
    out_dtype = x.dtype
    out_bytes = jnp.dtype(out_dtype).itemsize

    vmem_budget = _vmem_budget_bytes()

    # Row (M) tiling: clamp to the problem so tiny batches are not over-padded.
    tm = min(tm_pref, _round_up(max(M, 1), 8))
    tm = max(8, (tm // 8) * 8)

    if split_k:
        # ----------------------- split-K fallback (K > max_full_k) ----------
        def footprint(tm_):
            return (2 * (tm_ * tk * x_bytes + tk * tn * w_bytes + tn * 4)
                    + 2 * tm_ * tn * out_bytes
                    + tm_ * tn * 4)                       # f32 accumulator

        while tm > 8 and footprint(tm) > vmem_budget:
            tm = max(8, ((tm // 2) // 8) * 8)

        Mp = _round_up(M, tm)
        pad_m, pad_k = Mp - M, Kp - K   # K zero-padding contributes nothing
        if pad_m or pad_k:
            x2 = jnp.pad(x2, ((0, pad_m), (0, pad_k)))

        grid = (Mp // tm, Np // tn, Kp // tk)
        kernel = functools.partial(_linear_kernel_splitk, compute_dtype=compute_dtype)
        in_specs = [
            pl.BlockSpec((tm, tk), lambda i, j, k: (i, k)),
            # TODO(synk): pipeline_mode=pl.Buffered(3) here if profiling shows
            #             exposed K-dim weight DMA for skinny-M shapes.
            pl.BlockSpec((tk, tn), lambda i, j, k: (k, j)),
            pl.BlockSpec((1, tn), lambda i, j, k: (0, j)),
        ]
        out_specs = pl.BlockSpec((tm, tn), lambda i, j, k: (i, j))
        scratch_shapes = [pltpu.VMEM((tm, tn), jnp.float32)]
        dim_sem = ("parallel", "parallel", "arbitrary")

        vmem_bytes = footprint(tm)
        cost = pl.CostEstimate(
            flops=2 * Mp * Kp * Np,
            transcendentals=0,
            bytes_accessed=((Np // tn) * Mp * Kp * x_bytes          # x re-read per j
                            + (Mp // tm) * Kp * Np * w_bytes        # w re-read per i
                            + Mp * Np * out_bytes + Np * 4),
        )
    else:
        # ----------------------- full-K fast path ---------------------------
        # Prefer a whole-N weight block (constant block index -> the weight is
        # fetched into VMEM once and stays resident for the entire grid).
        def footprint(tm_, tn_):
            return (2 * tm_ * Kp * x_bytes          # double-buffered x tile
                    + 2 * Kp * tn_ * w_bytes        # weight block buffers
                    + 2 * tm_ * tn_ * out_bytes     # double-buffered out tile
                    + 2 * tn_ * 4)                  # bias

        tn_eff = Np
        while tm > 8 and footprint(tm, tn_eff) > vmem_budget:
            tm = max(8, ((tm // 2) // 8) * 8)
        if footprint(tm, tn_eff) > vmem_budget:
            # Weight too large for residency on this generation: stream
            # (Kp, tn) blocks per output column tile instead.
            tn_eff = tn
            while tm > 8 and footprint(tm, tn_eff) > vmem_budget:
                tm = max(8, ((tm // 2) // 8) * 8)

        Mp = _round_up(M, tm)
        if Mp - M:
            x2 = jnp.pad(x2, ((0, Mp - M), (0, 0)))
        grid_m = Mp // tm

        # Megacore (v7x has 2 TensorCores sharded over parallel grid axes):
        # with a single row block, split N so both cores get work.
        if grid_m == 1 and Np // tn_eff == 1 and Np >= 256 and (Np // 2) % 128 == 0:
            tn_eff = Np // 2
        grid_n = Np // tn_eff
        grid = (grid_m, grid_n)

        kernel = functools.partial(_linear_kernel_fullk, compute_dtype=compute_dtype)
        in_specs = [
            pl.BlockSpec((tm, Kp), lambda i, j: (i, 0)),
            # Constant block index when tn_eff == Np -> VMEM-resident weight.
            pl.BlockSpec((Kp, tn_eff), lambda i, j: (0, j)),
            # Constant block index when tn_eff == Np -> VMEM-resident bias.
            pl.BlockSpec((1, tn_eff), lambda i, j: (0, j)),
        ]
        out_specs = pl.BlockSpec((tm, tn_eff), lambda i, j: (i, j))
        scratch_shapes = []
        dim_sem = ("parallel", "parallel")

        vmem_bytes = footprint(tm, tn_eff)
        w_reads = grid_m if grid_n > 1 else 1   # resident weight is read once
        cost = pl.CostEstimate(
            flops=2 * Mp * Kp * Np,
            transcendentals=0,
            bytes_accessed=(Mp * Kp * x_bytes
                            + w_reads * Kp * Np * w_bytes
                            + Mp * Np * out_bytes + Np * 4),
        )

    # Generation-aware VMEM limit (headroom for semaphores / compiler scratch).
    vmem_limit = int(min(max(vmem_bytes + (4 << 20), 32 << 20), vmem_budget))

    out_p = pl.pallas_call(
        kernel,
        out_shape=jax.ShapeDtypeStruct((Mp, Np), out_dtype),
        grid_spec=pltpu.PrefetchScalarGridSpec(
            num_scalar_prefetch=0,
            grid=grid,
            in_specs=in_specs,
            out_specs=out_specs,
            scratch_shapes=scratch_shapes,
        ),
        compiler_params=pltpu.CompilerParams(
            dimension_semantics=dim_sem,
            vmem_limit_bytes=vmem_limit,
        ),
        cost_estimate=cost,
    )(x2, w_p, b_p)

    out = out_p[:M, :out_features]
    return out.reshape(*lead_shape, out_features)


# ---------------------------------------------------------------------------
# Module wrapper: holds pre-transposed / pre-padded parameters
# ---------------------------------------------------------------------------
class PallasLinear:
    """y = x @ W^T + b, matching the Conformer PyTorch `Linear` forward.

    compute_dtype defaults to bf16 (MXU-native on v5e/v6e/v7x) with f32
    accumulation; pass compute_dtype=None for a pure-f32 path.
    """

    def __init__(self, weight, bias=None, *, tm=512, tn=256, tk=512,
                 max_full_k=2048, compute_dtype=jnp.bfloat16):
        weight = jnp.asarray(weight)
        out_features, in_features = weight.shape
        self.out_features = int(out_features)
        self.in_features = int(in_features)
        self.tm_pref = int(tm)
        self.compute_dtype = compute_dtype

        # N: pad UP to a multiple of the preferred MXU-aligned tile instead of
        # shrinking the tile (lane-dense output, fewer grid steps).
        np_base = _round_up(self.out_features, 128)
        self.tn = max(128, (min(int(tn), np_base) // 128) * 128)
        n_pad = _round_up(np_base, self.tn)

        # Common case (Conformer-sized in_features): single full-K block,
        # no K padding of activations, no accumulator. Otherwise split-K.
        if self.in_features <= max_full_k:
            self.split_k = False
            self.tk = self.in_features
            k_pad = self.in_features
        else:
            self.split_k = True
            kp_base = _round_up(self.in_features, 128)
            self.tk = max(128, (min(int(tk), kp_base) // 128) * 128)
            k_pad = _round_up(kp_base, self.tk)

        # One-time weight prep (hoisted out of the per-call jit path):
        # transpose to (K, N), cast to the MXU compute dtype, zero-pad.
        w_dtype = compute_dtype if compute_dtype is not None else weight.dtype
        w_t = weight.T.astype(w_dtype)
        self.w_p = jnp.pad(
            w_t,
            ((0, k_pad - self.in_features), (0, n_pad - self.out_features)),
        )
        if bias is None:
            bias = jnp.zeros((self.out_features,), dtype=jnp.float32)
        b = jnp.asarray(bias, dtype=jnp.float32).reshape(1, -1)
        self.b_p = jnp.pad(b, ((0, 0), (0, n_pad - self.out_features)))

    def __call__(self, x):
        # Note: passing x already in bf16 skips the in-kernel cast and halves
        # activation DMA bytes (useful when chaining Conformer FFN layers).
        return _linear_forward(
            x, self.w_p, self.b_p,
            tm_pref=self.tm_pref, tn=self.tn, tk=self.tk,
            split_k=self.split_k, compute_dtype=self.compute_dtype,
            out_features=self.out_features,
        )


def init_linear_params(key, in_features, out_features, dtype=jnp.float32):
    """Matches nn.Linear weight shape + xavier_uniform_ init, zero bias."""
    limit = (6.0 / (in_features + out_features)) ** 0.5
    weight = jax.random.uniform(
        key, (out_features, in_features), dtype=dtype, minval=-limit, maxval=limit
    )
    bias = jnp.zeros((out_features,), dtype=dtype)
    return weight, bias


if __name__ == "__main__":
    key = jax.random.PRNGKey(0)
    k_x, k_w = jax.random.split(key)

    batch, seq, in_features, out_features = 2, 8, 32, 64
    x = jax.random.normal(k_x, (batch, seq, in_features), dtype=jnp.float32)
    weight, bias = init_linear_params(k_w, in_features, out_features)

    y_ref = x @ weight.T + bias

    # Default path: bf16 MXU compute with f32 accumulation.
    linear = PallasLinear(weight, bias)
    y = linear(x)
    jax.block_until_ready(y)
    assert y.shape == (batch, seq, out_features)
    assert jnp.allclose(y, y_ref, atol=5e-2, rtol=5e-2), "bf16-compute path mismatch"

    # f32 compute path: exact-ish check against the plain-JAX reference.
    linear_f32 = PallasLinear(weight, bias, compute_dtype=None)
    y32 = linear_f32(x)
    jax.block_until_ready(y32)
    assert jnp.allclose(y32, y_ref, atol=1e-5, rtol=1e-5), "f32-compute path mismatch"

    print("KERNEL_OK")
</pallas_src>

<mosaic_0001>
module attributes {stable_mosaic.version = 11 : i64} {
  func.func @_linear_kernel_fullk(%arg0: i32, %arg1: i32, %arg2: memref<16x32xf32, #tpu.memory_space<vmem>>, %arg3: memref<32x128xbf16, #tpu.memory_space<vmem>>, %arg4: memref<1x128xf32, #tpu.memory_space<vmem>>, %arg5: memref<16x128xf32, #tpu.memory_space<vmem>>) attributes {dimension_semantics = [#tpu.dimension_semantics<parallel>, #tpu.dimension_semantics<parallel>], iteration_bounds = array<i64: 1, 1>, scalar_prefetch = 0 : i64, scratch_operands = 0 : i64, tpu.core_type = #tpu.core_type<tc>, window_params = [{transform_indices = @transform_0, window_bounds = array<i64: 16, 32>}, {transform_indices = @transform_1, window_bounds = array<i64: 32, 128>}, {transform_indices = @transform_2, window_bounds = array<i64: 1, 128>}, {transform_indices = @transform_3, window_bounds = array<i64: 16, 128>}]} {
    %c0 = arith.constant 0 : index
    %c0_0 = arith.constant 0 : index
    %0 = vector.load %arg2[%c0, %c0_0] : memref<16x32xf32, #tpu.memory_space<vmem>>, vector<16x32xf32>
    %c0_1 = arith.constant 0 : index
    %c0_2 = arith.constant 0 : index
    %1 = vector.load %arg3[%c0_1, %c0_2] : memref<32x128xbf16, #tpu.memory_space<vmem>>, vector<32x128xbf16>
    %2 = arith.truncf %0 : vector<16x32xf32> to vector<16x32xbf16>
    %cst = arith.constant dense<0.000000e+00> : vector<16x128xf32>
    %3 = tpu.matmul %2, %1, %cst {dimension_numbers = #tpu.dot_dimension_numbers<[1], [0], [0], [1], [0, 0, 1, 1], [], []>} : vector<16x32xbf16>, vector<32x128xbf16>, vector<16x128xf32> -> vector<16x128xf32>
    %c0_3 = arith.constant 0 : index
    %c0_4 = arith.constant 0 : index
    %4 = vector.load %arg4[%c0_3, %c0_4] : memref<1x128xf32, #tpu.memory_space<vmem>>, vector<1x128xf32>
    %5 = vector.broadcast %4 : vector<1x128xf32> to vector<16x128xf32>
    %6 = arith.addf %3, %5 : vector<16x128xf32>
    %c0_5 = arith.constant 0 : index
    %c0_6 = arith.constant 0 : index
    %7 = vector.load %arg5[%c0_5, %c0_6] : memref<16x128xf32, #tpu.memory_space<vmem>>, vector<16x128xf32>
    tpu.vector_store %arg5[%c0_5, %c0_6], %6 {strides = array<i32>} : memref<16x128xf32, #tpu.memory_space<vmem>>, vector<16x128xf32>,
    return
  }
  func.func @transform_0(%arg0: i32, %arg1: i32) -> (i32, i32) {
    %c0_i32 = arith.constant 0 : i32
    %c0_i32_0 = arith.constant 0 : i32
    return %arg0, %c0_i32 : i32, i32
  }
  func.func @transform_1(%arg0: i32, %arg1: i32) -> (i32, i32) {
    %c0_i32 = arith.constant 0 : i32
    %c0_i32_0 = arith.constant 0 : i32
    return %c0_i32, %arg1 : i32, i32
  }
  func.func @transform_2(%arg0: i32, %arg1: i32) -> (i32, i32) {
    %c0_i32 = arith.constant 0 : i32
    %c0_i32_0 = arith.constant 0 : i32
    return %c0_i32, %arg1 : i32, i32
  }
  func.func @transform_3(%arg0: i32, %arg1: i32) -> (i32, i32) {
    %c0_i32 = arith.constant 0 : i32
    return %arg0, %arg1 : i32, i32
  }
}

</mosaic_0001>

<llo_original>
// kernel: _linear_forward.1
$region0: #{_linear_forward.1}
  #allocation0 [shape = 'u32[]', space=smem, size = 0x4, offset = 0x4, fixed_abs, tag = 'smem constant byte address 0x4 - core index']
  #allocation1 [shape = 'u32[72,128]{1,0:T(1,128)}', space=vmem, size = 0x9000, scoped, tag = 'internal scratch']
  %s0 = inlined_call_operand.hbm [shape: f32[16,32], index: 0, kind: input, shape index: {}]
  %s1 = inlined_call_operand.hbm [shape: bf16[32,128], index: 1, kind: input, shape index: {}]
  %s2 = inlined_call_operand.vmem [shape: f32[1,128], index: 2, kind: input, shape index: {}]
  %s3 = inlined_call_operand.vmem [shape: f32[16,128], index: 3, kind: output, shape index: {}]
  %s4 = sld [smem:[#allocation0]]
  $region30: #{_linear_forward.1} parent=0
    _
  %s6 = ssub.s32 1, %s4
  %s7 = scalar_select 0, %s6, %s4
  $region1: #{_linear_forward.1} parent=0
    #allocation2 [shape = 'u8[8192]{0}', space=vmem, size = 0x2000, scoped, tag = 'input window, operand 0, single buffered']
    #allocation3 [shape = 's32[1]{0}', space=sflag, size = 0x4, scoped, tag = 'scoped memory for _linear_forward.1']
    #allocation4 [shape = 'u8[8192]{0}', space=vmem, size = 0x2000, scoped, tag = 'input window, operand 1, single buffered']
    #allocation5 [shape = 's32[1]{0}', space=sflag, size = 0x4, scoped, tag = 'scoped memory for _linear_forward.1']
    %8 = vsyncpa [#allocation3], 0
    %9 = vsyncpa [#allocation5], 0
    // Predicated region
    $region2: #{_linear_forward.1} parent=1 // pred_check
      _
    $region3: #{_linear_forward.1} parent=1 // pred_check_branch
      %11 = sbr.rel (0) target = $region5
    $region4: #{_linear_forward.1} parent=1 // pred_region
      %13 = vsyncadd [#allocation3], 0
      %s14 = sshll.u32 %s0, 4
      %s15 = int_to_ptr.hbm [resolvable:$true] %s14
      %s16 = sshll.u32 [#allocation2], 4
      %s17 = int_to_ptr.vmem [resolvable:$true] %s16
      %22 = dma.hbm_to_vmem [thread:$0]  %s15, 256, %s17, [#allocation3], 128, 128, 8
    $region5: #{_linear_forward.1} parent=1 // pred_fallthru
      _
    // Predicated region
    $region6: #{_linear_forward.1} parent=1 // pred_check
      _
    $region7: #{_linear_forward.1} parent=1 // pred_check_branch
      %24 = sbr.rel (0) target = $region9
    $region8: #{_linear_forward.1} parent=1 // pred_region
      %26 = vsyncadd [#allocation5], 0
      %s27 = sshll.u32 %s1, 4
      %s28 = int_to_ptr.hbm [resolvable:$true] %s27
      %s29 = sshll.u32 [#allocation4], 4
      %s30 = int_to_ptr.vmem [resolvable:$true] %s29
      %35 = dma.hbm_to_vmem [thread:$0]  %s28, 256, %s30, [#allocation5], 64, 64, 4
    $region9: #{_linear_forward.1} parent=1 // pred_fallthru
      _
    // Predicated region
    $region10: #{_linear_forward.1} parent=1 // pred_check
      _
    $region11: #{_linear_forward.1} parent=1 // pred_check_branch
      %37 = sbr.rel (0) target = $region13
    $region12: #{_linear_forward.1} parent=1 // pred_region
      _
    $region13: #{_linear_forward.1} parent=1 // pred_fallthru
      _
    // Predicated region
    $region14: #{_linear_forward.1} parent=1 // pred_check
      _
    $region15: #{_linear_forward.1} parent=1 // pred_check_branch
      %39 = sbr.rel (0) target = $region17
    $region16: #{_linear_forward.1} parent=1 // pred_region
      %41 = dma.done [#allocation3], 256
    $region17: #{_linear_forward.1} parent=1 // pred_fallthru
      _
    // Predicated region
    $region18: #{_linear_forward.1} parent=1 // pred_check
      _
    $region19: #{_linear_forward.1} parent=1 // pred_check_branch
      %43 = sbr.rel (0) target = $region21
    $region20: #{_linear_forward.1} parent=1 // pred_region
      %45 = dma.done [#allocation5], 256
    $region21: #{_linear_forward.1} parent=1 // pred_fallthru
      _
    %v47 = vld [vmem:[#allocation2] sm:$0xff]
    %v48 = vld [vmem:[#allocation2 + $0x8] sm:$0xff]
    %v49 = vld [vmem:[#allocation4] sm:$0xf]
    %v50 = vld [vmem:[#allocation4 + $0x4] sm:$0xf]
    %v51 = vld [vmem:[#allocation4 + $0x8] sm:$0xf]
    %v52 = vld [vmem:[#allocation4 + $0xc] sm:$0xf]
    %v53 = vpack.c.bf16 %v48, %v47
    %v54 = vld [vmem:[%s2] sm:$0x1]
    %v56 = vperm.slane %v54, 0
    %v62 = vunpack.c.l.b16 %v49
    %v63 = vunpack.c.l.b16 %v50
    %v64 = vunpack.c.l.b16 %v51
    %v65 = vunpack.c.l.b16 %v52
    %v66 = vpack.c.b16 %v63, %v62
    %v67 = vpack.c.b16 %v65, %v64
    %vm70 = vcmask 261120
    %v72 = vsel %vm70, %v53, 0
    %74 = vmatpush.bf16.msra.mxu0 0
    %75 = vmatpush.bf16.msra.mxu0 0
    %76 = vmatpush.bf16.msra.mxu0 0
    %77 = vmatpush.bf16.msra.mxu0 0
    %78 = vmatpush.bf16.msra.mxu0 0
    %79 = vmatpush.bf16.msra.mxu0 0
    %80 = vmatpush.bf16.msra.mxu0 %v67
    %81 = vmatpush.bf16.msra.mxu0 %v66
    %82 = vmatmul.bf16.gmra.mxu0 %v72
    %v83 = vpop.f32.mrf.mxu0
    %v84 = vadd.f32 %v56, %v83
    %v85 = vpop.f32.mrf.mxu0
    %v86 = vadd.f32 %v56, %v85
    %87 = vdwg.mxu0
    %88 = vst [vmem:[%s3] sm:$0xff] %v84
    %89 = vst [vmem:[%s3 + $0x8] sm:$0xff] %v86
    // Predicated region
    $region22: #{_linear_forward.1} parent=1 // pred_check
      _
    $region23: #{_linear_forward.1} parent=1 // pred_check_branch
      %91 = sbr.rel (0) target = $region25
    $region24: #{_linear_forward.1} parent=1 // pred_region
      _
    $region25: #{_linear_forward.1} parent=1 // pred_fallthru
      _
    // Predicated region
    $region26: #{_linear_forward.1} parent=1 // pred_check
      _
    $region27: #{_linear_forward.1} parent=1 // pred_check_branch
      %93 = sbr.rel (0) target = $region29
    $region28: #{_linear_forward.1} parent=1 // pred_region
      _
    $region29: #{_linear_forward.1} parent=1 // pred_fallthru
      _
    %94 = vsyncpa [#allocation3], 1
    %95 = vsyncpa [#allocation5], 1

</llo_original>
